<compile_context>
chip_gen: v5e
topology: v5e:2x2
jax: 0.10.0
libtpu: 0.0.40
codegen_flags: <defaults>
</compile_context>

<pallas_src>
import functools

import jax
import jax.numpy as jnp
from jax import lax
from jax.experimental import pallas as pl
from jax.experimental.pallas import tpu as pltpu


def _info_nce_tiled_kernel(a_ref, b_ref, out_ref, lhs_sc, m_sc, l_sc, pos_sc,
                           *, batch_size, inv_temperature, exp_dtype):
    """One (row-tile, col-tile) step of the tiled InfoNCE forward.

    a_ref:   [T, D] row tile of pre-normalized features  (block index = q)
    b_ref:   [T, D] col tile of pre-normalized features  (block index = k)
    out_ref: [T, 1] per-row loss (written only at the last col tile)
    lhs_sc:  [T, D] matmul_dtype scratch: row tile scaled by 1/temperature
    m_sc/l_sc/pos_sc: [T, 1] f32 running max / running sum / positive logit.
    """
    q = pl.program_id(0)
    k = pl.program_id(1)
    t = a_ref.shape[0]

    @pl.when(k == 0)
    def _():
        # Fold 1/temperature into the resident row tile ONCE per row tile; it
        # is then reused as the MXU LHS for every col tile (its DMA is already
        # skipped across k because its block index is constant in k).
        lhs_sc[...] = (a_ref[...].astype(jnp.float32) * inv_temperature
                       ).astype(lhs_sc.dtype)
        m_sc[...] = jnp.full_like(m_sc, -jnp.inf)
        l_sc[...] = jnp.zeros_like(l_sc)
        pos_sc[...] = jnp.zeros_like(pos_sc)

    # sim[i, j] = <f_i, f_j> / temperature.  Contract the last dims of both
    # operands (no explicit transpose); f32 accumulation on the MXU.
    sim = lax.dot_general(lhs_sc[...], b_ref[...],
                          dimension_numbers=(((1,), (1,)), ((), ())),
                          preferred_element_type=jnp.float32)   # [T, T]

    # ---- positive logit (numerator): only touched when this (q, k) tile can
    # actually contain one (row r pairs with col r + B or r - B, n_views == 2).
    row0 = q * t
    col0 = k * t
    hit_plus = jnp.logical_and(row0 + batch_size < col0 + t,
                               row0 + t + batch_size > col0)
    hit_minus = jnp.logical_and(row0 - batch_size < col0 + t,
                                row0 + t - batch_size > col0)

    @pl.when(jnp.logical_or(hit_plus, hit_minus))
    def _():
        delta = ((row0 + lax.broadcasted_iota(jnp.int32, (t, t), 0))
                 - (col0 + lax.broadcasted_iota(jnp.int32, (t, t), 1)))
        pos_sc[...] += jnp.sum(
            jnp.where(jnp.abs(delta) == batch_size, sim, 0.0),
            axis=1, keepdims=True)

    # ---- online (streaming) logsumexp over all off-diagonal logits.
    def online_update(logits):
        m_prev = m_sc[...]
        m_new = jnp.maximum(m_prev, jnp.max(logits, axis=1, keepdims=True))
        # exp in exp_dtype (bf16 on the fast path: the EUP is the saturating
        # slot for typical D); row-sum accumulated in f32.
        p = jnp.exp((logits - m_new).astype(exp_dtype))
        l_sc[...] = (l_sc[...] * jnp.exp(m_prev - m_new)
                     + jnp.sum(p, axis=1, keepdims=True, dtype=jnp.float32))
        m_sc[...] = m_new

    @pl.when(q == k)
    def _():
        # Diagonal tile: drop the self-similarity before the logsumexp.
        i = lax.broadcasted_iota(jnp.int32, (t, t), 0)
        j = lax.broadcasted_iota(jnp.int32, (t, t), 1)
        online_update(jnp.where(i == j, jnp.float32(-1e30), sim))

    @pl.when(q != k)
    def _():
        # Off-diagonal tile: no masking work at all.
        online_update(sim)

    @pl.when(k == pl.num_programs(1) - 1)
    def _():
        out_ref[...] = (m_sc[...] + jnp.log(l_sc[...])) - pos_sc[...]


def _vmem_budget():
    """(tile-selection working-set budget, vmem_limit_bytes) per generation."""
    phys = 64 * 1024 * 1024           # conservative default: v7x = 64 MiB/core
    try:
        info = pltpu.get_tpu_info()
        cap = getattr(info, "vmem_capacity_bytes", None)
        if cap:
            phys = int(cap)
    except Exception:
        pass
    budget = phys // 2                              # 32 MiB (v7x) / 64 MiB (v5e/v6e)
    limit = min((phys * 3) // 4, 100 * 1024 * 1024)  # 48 MiB (v7x) / 96 MiB (v5e/v6e)
    return budget, int(limit)


def _pick_tile(n, d, in_itemsize, budget):
    """Largest MXU-friendly tile that divides N, keeps the working set under
    the per-generation VMEM budget, and (if possible) leaves >= 2 row blocks
    so both v7x TensorCores get work on the 'parallel' axis."""
    candidates = [t for t in (1024, 512, 256, 128) if n % t == 0]
    best_single = None
    for t in candidates:                       # descending
        est = (5 * t * d * in_itemsize         # 2 inputs x 2 pipeline bufs + LHS scratch
               + 2 * t * d * 4                 # f32 temp of the one-time LHS rescale
               + 8 * t * t * 4)                # [T,T] f32/i32 temporaries + headroom
        if est > budget:
            continue
        if n // t >= 2:
            return t
        if best_single is None:
            best_single = t
    if best_single is not None:
        return best_single
    return n  # small problems: a single full-extent block is always legal


def info_nce_loss(features, *, batch_size, temperature=0.7, n_views=2,
                  tile=None, matmul_dtype=jnp.bfloat16, exp_dtype=None):
    """features: [n_views * batch_size, dim]  ->  scalar loss (float32).

    matmul_dtype=jnp.bfloat16 stores the pre-normalized features in bf16
    (halves HBM traffic) and feeds the MXU at its fast rate (f32 accumulation);
    the softmax exponent then also runs in bf16 (f32 row-sum).  Pass
    matmul_dtype=jnp.float32 (and optionally exp_dtype=jnp.float32) for
    bit-closer results, e.g. on v5e where bf16 EUP brings no speedup.
    """
    assert n_views == 2, "kernel implements the module's default n_views=2"
    n, d = features.shape
    assert n == n_views * batch_size

    if exp_dtype is None:
        exp_dtype = (jnp.bfloat16
                     if jnp.dtype(matmul_dtype) == jnp.dtype(jnp.bfloat16)
                     else jnp.float32)

    # Pre-normalize ONCE (O(N*D), in the wrapper).  Matches F.normalize
    # (dim=1, eps=1e-12):  rsqrt(max(sum(x^2), 1e-24)) == 1/max(||x||, 1e-12).
    f32 = features.astype(jnp.float32)
    inv_norm = lax.rsqrt(
        jnp.maximum(jnp.sum(f32 * f32, axis=1, keepdims=True), 1e-24))
    f_norm = (f32 * inv_norm).astype(matmul_dtype)

    budget, vmem_limit = _vmem_budget()
    if tile is None:
        tile = _pick_tile(n, d, jnp.dtype(matmul_dtype).itemsize, budget)
    assert n % tile == 0, (n, tile)
    grid = (n // tile, n // tile)

    kernel = functools.partial(
        _info_nce_tiled_kernel,
        batch_size=batch_size,
        inv_temperature=1.0 / float(temperature),
        exp_dtype=exp_dtype,
    )

    per_row = pl.pallas_call(
        kernel,
        out_shape=jax.ShapeDtypeStruct((n, 1), jnp.float32),
        grid_spec=pltpu.PrefetchScalarGridSpec(
            num_scalar_prefetch=0,
            grid=grid,
            in_specs=[
                pl.BlockSpec((tile, d), lambda q, k: (q, 0)),   # row tile
                pl.BlockSpec((tile, d), lambda q, k: (k, 0)),   # col tile
            ],
            out_specs=pl.BlockSpec((tile, 1), lambda q, k: (q, 0)),
            scratch_shapes=[
                pltpu.VMEM((tile, d), matmul_dtype),   # 1/temperature-scaled LHS
                pltpu.VMEM((tile, 1), jnp.float32),    # running max
                pltpu.VMEM((tile, 1), jnp.float32),    # running sum
                pltpu.VMEM((tile, 1), jnp.float32),    # positive logit
            ],
        ),
        compiler_params=pltpu.CompilerParams(
            dimension_semantics=("parallel", "arbitrary"),
            vmem_limit_bytes=vmem_limit,
        ),
    )(f_norm, f_norm)

    # Scalar mean finished in the wrapper (keep the epilogue out of the kernel;
    # the [N, 1] per-row losses are what a backward pass wants anyway).
    return jnp.mean(per_row)


def _info_nce_ref(features, *, batch_size, temperature=0.7):
    """Pure-JAX reference mirroring the PyTorch forward (for verification)."""
    f = features.astype(jnp.float32)
    f = f / jnp.maximum(jnp.linalg.norm(f, axis=1, keepdims=True), 1e-12)
    sim = jnp.matmul(f, f.T, precision=lax.Precision.HIGHEST) / temperature
    n = sim.shape[0]
    i = jnp.arange(n)
    diag = i[:, None] == i[None, :]
    pos_mask = jnp.abs(i[:, None] - i[None, :]) == batch_size
    masked = jnp.where(diag, -1e30, sim)
    lse = jax.scipy.special.logsumexp(masked, axis=1)
    pos = jnp.sum(jnp.where(pos_mask, sim, 0.0), axis=1)
    return jnp.mean(lse - pos)


if __name__ == "__main__":
    key = jax.random.PRNGKey(0)
    k0, k1, k2 = jax.random.split(key, 3)
    temperature = 0.7

    # --- tiny shape from the module spec: batch=2, n_views=2, dim=32 -------
    batch_size, n_views, dim = 2, 2, 32
    feats = jax.random.normal(k0, (n_views * batch_size, dim), jnp.float32)
    ref = _info_nce_ref(feats, batch_size=batch_size, temperature=temperature)

    # precise path (f32 features / matmul / exp)
    loss_f32 = info_nce_loss(feats, batch_size=batch_size,
                             temperature=temperature,
                             matmul_dtype=jnp.float32)
    loss_f32 = jax.block_until_ready(loss_f32)
    assert jnp.allclose(loss_f32, ref, rtol=5e-3, atol=5e-3), (loss_f32, ref)

    # fast path (bf16 normalized features, bf16 MXU + bf16 exp, f32 accums)
    loss_bf16 = info_nce_loss(feats, batch_size=batch_size,
                              temperature=temperature)
    loss_bf16 = jax.block_until_ready(loss_bf16)
    assert jnp.allclose(loss_bf16, ref, rtol=2e-2, atol=5e-2), (loss_bf16, ref)

    # --- multi-tile path: online logsumexp, cross-tile positives, scalar-gated
    #     diagonal / positive masking across the (q, k) grid -------------------
    b2, d2 = 128, 128
    feats2 = jax.random.normal(k1, (2 * b2, d2), jnp.float32)
    ref2 = _info_nce_ref(feats2, batch_size=b2, temperature=temperature)
    loss2 = info_nce_loss(feats2, batch_size=b2, temperature=temperature,
                          tile=128, matmul_dtype=jnp.float32)
    loss2 = jax.block_until_ready(loss2)
    assert jnp.allclose(loss2, ref2, rtol=5e-3, atol=5e-3), (loss2, ref2)

    # --- tile not dividing batch_size (positives straddle col-tile edges) ---
    b3, d3 = 96, 128
    feats3 = jax.random.normal(k2, (2 * b3, d3), jnp.float32)
    ref3 = _info_nce_ref(feats3, batch_size=b3, temperature=temperature)
    loss3 = info_nce_loss(feats3, batch_size=b3, temperature=temperature,
                          tile=64, matmul_dtype=jnp.float32)
    loss3 = jax.block_until_ready(loss3)
    assert jnp.allclose(loss3, ref3, rtol=5e-3, atol=5e-3), (loss3, ref3)

    print("KERNEL_OK")
</pallas_src>

<mosaic_0001>
module attributes {stable_mosaic.version = 11 : i64} {
  func.func @_info_nce_tiled_kernel(%arg0: i32, %arg1: i32, %arg2: memref<4x32xf32, #tpu.memory_space<vmem>>, %arg3: memref<4x32xf32, #tpu.memory_space<vmem>>, %arg4: memref<4x1xf32, #tpu.memory_space<vmem>>, %arg5: memref<4x32xf32, #tpu.memory_space<vmem>>, %arg6: memref<4x1xf32, #tpu.memory_space<vmem>>, %arg7: memref<4x1xf32, #tpu.memory_space<vmem>>, %arg8: memref<4x1xf32, #tpu.memory_space<vmem>>) attributes {dimension_semantics = [#tpu.dimension_semantics<parallel>, #tpu.dimension_semantics<arbitrary>], iteration_bounds = array<i64: 1, 1>, scalar_prefetch = 0 : i64, scratch_operands = 4 : i64, tpu.core_type = #tpu.core_type<tc>, window_params = [{transform_indices = @transform_0, window_bounds = array<i64: 4, 32>}, {transform_indices = @transform_1, window_bounds = array<i64: 4, 32>}, {transform_indices = @transform_2, window_bounds = array<i64: 4, 1>}]} {
    %c0_i32 = arith.constant 0 : i32
    %0 = arith.cmpi eq, %arg1, %c0_i32 : i32
    %1 = arith.extui %0 : i1 to i32
    %c0_i32_0 = arith.constant 0 : i32
    %2 = arith.cmpi ne, %1, %c0_i32_0 : i32
    scf.if %2 {
      %c0_17 = arith.constant 0 : index
      %c0_18 = arith.constant 0 : index
      %34 = vector.load %arg2[%c0_17, %c0_18] : memref<4x32xf32, #tpu.memory_space<vmem>>, vector<4x32xf32>
      %cst_19 = arith.constant 1.42857146 : f32
      %35 = vector.broadcast %cst_19 : f32 to vector<4x32xf32>
      %36 = arith.mulf %34, %35 : vector<4x32xf32>
      %c0_20 = arith.constant 0 : index
      %c0_21 = arith.constant 0 : index
      %37 = vector.load %arg5[%c0_20, %c0_21] : memref<4x32xf32, #tpu.memory_space<vmem>>, vector<4x32xf32>
      tpu.vector_store %arg5[%c0_20, %c0_21], %36 {strides = array<i32>} : memref<4x32xf32, #tpu.memory_space<vmem>>, vector<4x32xf32>,
      %cst_22 = arith.constant 0xFF800000 : f32
      %38 = vector.broadcast %cst_22 : f32 to vector<4x1xf32>
      %c0_23 = arith.constant 0 : index
      %c0_24 = arith.constant 0 : index
      %39 = vector.load %arg6[%c0_23, %c0_24] : memref<4x1xf32, #tpu.memory_space<vmem>>, vector<4x1xf32>
      tpu.vector_store %arg6[%c0_23, %c0_24], %38 {strides = array<i32>} : memref<4x1xf32, #tpu.memory_space<vmem>>, vector<4x1xf32>,
      %cst_25 = arith.constant 0.000000e+00 : f32
      %40 = vector.broadcast %cst_25 : f32 to vector<4x1xf32>
      %c0_26 = arith.constant 0 : index
      %c0_27 = arith.constant 0 : index
      %41 = vector.load %arg7[%c0_26, %c0_27] : memref<4x1xf32, #tpu.memory_space<vmem>>, vector<4x1xf32>
      tpu.vector_store %arg7[%c0_26, %c0_27], %40 {strides = array<i32>} : memref<4x1xf32, #tpu.memory_space<vmem>>, vector<4x1xf32>,
      %cst_28 = arith.constant 0.000000e+00 : f32
      %42 = vector.broadcast %cst_28 : f32 to vector<4x1xf32>
      %c0_29 = arith.constant 0 : index
      %c0_30 = arith.constant 0 : index
      %43 = vector.load %arg8[%c0_29, %c0_30] : memref<4x1xf32, #tpu.memory_space<vmem>>, vector<4x1xf32>
      tpu.vector_store %arg8[%c0_29, %c0_30], %42 {strides = array<i32>} : memref<4x1xf32, #tpu.memory_space<vmem>>, vector<4x1xf32>,
    } else {
    }
    %c0 = arith.constant 0 : index
    %c0_1 = arith.constant 0 : index
    %3 = vector.load %arg5[%c0, %c0_1] : memref<4x32xf32, #tpu.memory_space<vmem>>, vector<4x32xf32>
    %c0_2 = arith.constant 0 : index
    %c0_3 = arith.constant 0 : index
    %4 = vector.load %arg3[%c0_2, %c0_3] : memref<4x32xf32, #tpu.memory_space<vmem>>, vector<4x32xf32>
    %cst = arith.constant dense<0.000000e+00> : vector<4x4xf32>
    %5 = tpu.matmul %3, %4, %cst {dimension_numbers = #tpu.dot_dimension_numbers<[1], [1], [0], [0], [0, 0, 1, 0], [], []>} : vector<4x32xf32>, vector<4x32xf32>, vector<4x4xf32> -> vector<4x4xf32>
    %c4_i32 = arith.constant 4 : i32
    %6 = arith.muli %arg0, %c4_i32 : i32
    %c4_i32_4 = arith.constant 4 : i32
    %7 = arith.muli %arg1, %c4_i32_4 : i32
    %c2_i32 = arith.constant 2 : i32
    %8 = arith.addi %6, %c2_i32 : i32
    %c4_i32_5 = arith.constant 4 : i32
    %9 = arith.addi %7, %c4_i32_5 : i32
    %10 = arith.cmpi slt, %8, %9 : i32
    %c4_i32_6 = arith.constant 4 : i32
    %11 = arith.addi %6, %c4_i32_6 : i32
    %c2_i32_7 = arith.constant 2 : i32
    %12 = arith.addi %11, %c2_i32_7 : i32
    %13 = arith.cmpi sgt, %12, %7 : i32
    %14 = arith.andi %10, %13 : i1
    %c2_i32_8 = arith.constant 2 : i32
    %15 = arith.subi %6, %c2_i32_8 : i32
    %c4_i32_9 = arith.constant 4 : i32
    %16 = arith.addi %7, %c4_i32_9 : i32
    %17 = arith.cmpi slt, %15, %16 : i32
    %c4_i32_10 = arith.constant 4 : i32
    %18 = arith.addi %6, %c4_i32_10 : i32
    %c2_i32_11 = arith.constant 2 : i32
    %19 = arith.subi %18, %c2_i32_11 : i32
    %20 = arith.cmpi sgt, %19, %7 : i32
    %21 = arith.andi %17, %20 : i1
    %22 = arith.ori %14, %21 : i1
    %23 = arith.extui %22 : i1 to i32
    %c0_i32_12 = arith.constant 0 : i32
    %24 = arith.cmpi ne, %23, %c0_i32_12 : i32
    scf.if %24 {
      %34 = tpu.iota {dimensions = array<i32: 0>} : vector<4x4xi32>
      %35 = vector.broadcast %6 : i32 to vector<4x4xi32>
      %36 = arith.addi %35, %34 : vector<4x4xi32>
      %37 = tpu.iota {dimensions = array<i32: 1>} : vector<4x4xi32>
      %38 = vector.broadcast %7 : i32 to vector<4x4xi32>
      %39 = arith.addi %38, %37 : vector<4x4xi32>
      %40 = arith.subi %36, %39 : vector<4x4xi32>
      %c0_17 = arith.constant 0 : index
      %c0_18 = arith.constant 0 : index
      %41 = vector.load %arg8[%c0_17, %c0_18] : memref<4x1xf32, #tpu.memory_space<vmem>>, vector<4x1xf32>
      %42 = math.absi %40 : vector<4x4xi32>
      %c2_i32_19 = arith.constant 2 : i32
      %43 = vector.broadcast %c2_i32_19 : i32 to vector<4x4xi32>
      %44 = arith.cmpi eq, %42, %43 : vector<4x4xi32>
      %cst_20 = arith.constant 0.000000e+00 : f32
      %45 = vector.broadcast %cst_20 : f32 to vector<4x4xf32>
      %46 = arith.select %44, %5, %45 : vector<4x4xi1>, vector<4x4xf32>
      %cst_21 = arith.constant dense<0.000000e+00> : vector<4xf32>
      %47 = vector.multi_reduction <add>, %46, %cst_21 [1] : vector<4x4xf32> to vector<4xf32>
      %48 = vector.shape_cast %47 : vector<4xf32> to vector<4x1xf32>
      %49 = arith.addf %41, %48 : vector<4x1xf32>
      %c0_22 = arith.constant 0 : index
      %c0_23 = arith.constant 0 : index
      %50 = vector.load %arg8[%c0_22, %c0_23] : memref<4x1xf32, #tpu.memory_space<vmem>>, vector<4x1xf32>
      tpu.vector_store %arg8[%c0_22, %c0_23], %49 {strides = array<i32>} : memref<4x1xf32, #tpu.memory_space<vmem>>, vector<4x1xf32>,
    } else {
    }
    %25 = arith.cmpi eq, %arg0, %arg1 : i32
    %26 = arith.extui %25 : i1 to i32
    %c0_i32_13 = arith.constant 0 : i32
    %27 = arith.cmpi ne, %26, %c0_i32_13 : i32
    scf.if %27 {
      %34 = tpu.iota {dimensions = array<i32: 0>} : vector<4x4xi32>
      %35 = tpu.iota {dimensions = array<i32: 1>} : vector<4x4xi32>
      %36 = arith.cmpi eq, %34, %35 : vector<4x4xi32>
      %cst_17 = arith.constant -1.000000e+30 : f32
      %37 = vector.broadcast %cst_17 : f32 to vector<4x4xf32>
      %38 = arith.select %36, %37, %5 : vector<4x4xi1>, vector<4x4xf32>
      %c0_18 = arith.constant 0 : index
      %c0_19 = arith.constant 0 : index
      %39 = vector.load %arg6[%c0_18, %c0_19] : memref<4x1xf32, #tpu.memory_space<vmem>>, vector<4x1xf32>
      %cst_20 = arith.constant dense<0xFF800000> : vector<4xf32>
      %40 = vector.multi_reduction <maximumf>, %38, %cst_20 [1] : vector<4x4xf32> to vector<4xf32>
      %41 = vector.shape_cast %40 : vector<4xf32> to vector<4x1xf32>
      %42 = arith.maximumf %39, %41 : vector<4x1xf32>
      %43 = vector.broadcast %42 : vector<4x1xf32> to vector<4x4xf32>
      %44 = arith.subf %38, %43 : vector<4x4xf32>
      %45 = math.exp %44 : vector<4x4xf32>
      %c0_21 = arith.constant 0 : index
      %c0_22 = arith.constant 0 : index
      %46 = vector.load %arg7[%c0_21, %c0_22] : memref<4x1xf32, #tpu.memory_space<vmem>>, vector<4x1xf32>
      %47 = arith.subf %39, %42 : vector<4x1xf32>
      %48 = math.exp %47 : vector<4x1xf32>
      %49 = arith.mulf %46, %48 : vector<4x1xf32>
      %cst_23 = arith.constant dense<0.000000e+00> : vector<4xf32>
      %50 = vector.multi_reduction <add>, %45, %cst_23 [1] : vector<4x4xf32> to vector<4xf32>
      %51 = vector.shape_cast %50 : vector<4xf32> to vector<4x1xf32>
      %52 = arith.addf %49, %51 : vector<4x1xf32>
      %c0_24 = arith.constant 0 : index
      %c0_25 = arith.constant 0 : index
      %53 = vector.load %arg7[%c0_24, %c0_25] : memref<4x1xf32, #tpu.memory_space<vmem>>, vector<4x1xf32>
      tpu.vector_store %arg7[%c0_24, %c0_25], %52 {strides = array<i32>} : memref<4x1xf32, #tpu.memory_space<vmem>>, vector<4x1xf32>,
      %c0_26 = arith.constant 0 : index
      %c0_27 = arith.constant 0 : index
      %54 = vector.load %arg6[%c0_26, %c0_27] : memref<4x1xf32, #tpu.memory_space<vmem>>, vector<4x1xf32>
      tpu.vector_store %arg6[%c0_26, %c0_27], %42 {strides = array<i32>} : memref<4x1xf32, #tpu.memory_space<vmem>>, vector<4x1xf32>,
    } else {
    }
    %28 = arith.cmpi ne, %arg0, %arg1 : i32
    %29 = arith.extui %28 : i1 to i32
    %c0_i32_14 = arith.constant 0 : i32
    %30 = arith.cmpi ne, %29, %c0_i32_14 : i32
    scf.if %30 {
      %c0_17 = arith.constant 0 : index
      %c0_18 = arith.constant 0 : index
      %34 = vector.load %arg6[%c0_17, %c0_18] : memref<4x1xf32, #tpu.memory_space<vmem>>, vector<4x1xf32>
      %cst_19 = arith.constant dense<0xFF800000> : vector<4xf32>
      %35 = vector.multi_reduction <maximumf>, %5, %cst_19 [1] : vector<4x4xf32> to vector<4xf32>
      %36 = vector.shape_cast %35 : vector<4xf32> to vector<4x1xf32>
      %37 = arith.maximumf %34, %36 : vector<4x1xf32>
      %38 = vector.broadcast %37 : vector<4x1xf32> to vector<4x4xf32>
      %39 = arith.subf %5, %38 : vector<4x4xf32>
      %40 = math.exp %39 : vector<4x4xf32>
      %c0_20 = arith.constant 0 : index
      %c0_21 = arith.constant 0 : index
      %41 = vector.load %arg7[%c0_20, %c0_21] : memref<4x1xf32, #tpu.memory_space<vmem>>, vector<4x1xf32>
      %42 = arith.subf %34, %37 : vector<4x1xf32>
      %43 = math.exp %42 : vector<4x1xf32>
      %44 = arith.mulf %41, %43 : vector<4x1xf32>
      %cst_22 = arith.constant dense<0.000000e+00> : vector<4xf32>
      %45 = vector.multi_reduction <add>, %40, %cst_22 [1] : vector<4x4xf32> to vector<4xf32>
      %46 = vector.shape_cast %45 : vector<4xf32> to vector<4x1xf32>
      %47 = arith.addf %44, %46 : vector<4x1xf32>
      %c0_23 = arith.constant 0 : index
      %c0_24 = arith.constant 0 : index
      %48 = vector.load %arg7[%c0_23, %c0_24] : memref<4x1xf32, #tpu.memory_space<vmem>>, vector<4x1xf32>
      tpu.vector_store %arg7[%c0_23, %c0_24], %47 {strides = array<i32>} : memref<4x1xf32, #tpu.memory_space<vmem>>, vector<4x1xf32>,
      %c0_25 = arith.constant 0 : index
      %c0_26 = arith.constant 0 : index
      %49 = vector.load %arg6[%c0_25, %c0_26] : memref<4x1xf32, #tpu.memory_space<vmem>>, vector<4x1xf32>
      tpu.vector_store %arg6[%c0_25, %c0_26], %37 {strides = array<i32>} : memref<4x1xf32, #tpu.memory_space<vmem>>, vector<4x1xf32>,
    } else {
    }
    %c0_i32_15 = arith.constant 0 : i32
    %31 = arith.cmpi eq, %arg1, %c0_i32_15 : i32
    %32 = arith.extui %31 : i1 to i32
    %c0_i32_16 = arith.constant 0 : i32
    %33 = arith.cmpi ne, %32, %c0_i32_16 : i32
    scf.if %33 {
      %c0_17 = arith.constant 0 : index
      %c0_18 = arith.constant 0 : index
      %34 = vector.load %arg6[%c0_17, %c0_18] : memref<4x1xf32, #tpu.memory_space<vmem>>, vector<4x1xf32>
      %c0_19 = arith.constant 0 : index
      %c0_20 = arith.constant 0 : index
      %35 = vector.load %arg7[%c0_19, %c0_20] : memref<4x1xf32, #tpu.memory_space<vmem>>, vector<4x1xf32>
      %36 = math.log %35 : vector<4x1xf32>
      %37 = arith.addf %34, %36 : vector<4x1xf32>
      %c0_21 = arith.constant 0 : index
      %c0_22 = arith.constant 0 : index
      %38 = vector.load %arg8[%c0_21, %c0_22] : memref<4x1xf32, #tpu.memory_space<vmem>>, vector<4x1xf32>
      %39 = arith.subf %37, %38 : vector<4x1xf32>
      %c0_23 = arith.constant 0 : index
      %c0_24 = arith.constant 0 : index
      %40 = vector.load %arg4[%c0_23, %c0_24] : memref<4x1xf32, #tpu.memory_space<vmem>>, vector<4x1xf32>
      tpu.vector_store %arg4[%c0_23, %c0_24], %39 {strides = array<i32>} : memref<4x1xf32, #tpu.memory_space<vmem>>, vector<4x1xf32>,
    } else {
    }
    return
  }
  func.func @transform_0(%arg0: i32, %arg1: i32) -> (i32, i32) {
    %c0_i32 = arith.constant 0 : i32
    %c0_i32_0 = arith.constant 0 : i32
    return %arg0, %c0_i32 : i32, i32
  }
  func.func @transform_1(%arg0: i32, %arg1: i32) -> (i32, i32) {
    %c0_i32 = arith.constant 0 : i32
    %c0_i32_0 = arith.constant 0 : i32
    return %arg1, %c0_i32 : i32, i32
  }
  func.func @transform_2(%arg0: i32, %arg1: i32) -> (i32, i32) {
    %c0_i32 = arith.constant 0 : i32
    %c0_i32_0 = arith.constant 0 : i32
    return %arg0, %c0_i32 : i32, i32
  }
}

</mosaic_0001>

<llo_original>
// kernel: tpu_custom_call.1
$region0: #{tpu_custom_call.1}
  #allocation0 [shape = 'u32[]', space=smem, size = 0x4, offset = 0x4, fixed_abs, tag = 'smem constant byte address 0x4 - core index']
  #allocation1 [shape = 'u32[72,128]{1,0:T(1,128)}', space=vmem, size = 0x9000, scoped, tag = 'internal scratch']
  #allocation2 [shape = 'f32[4,32]{1,0:T(4,128)}', space=vmem, size = 0x800, scoped, tag = 'scratch operand']
  #allocation3 [shape = 'f32[4,1]{1,0:T(4,128)}', space=vmem, size = 0x800, scoped, tag = 'scratch operand']
  #allocation4 [shape = 'f32[4,1]{1,0:T(4,128)}', space=vmem, size = 0x800, scoped, tag = 'scratch operand']
  #allocation5 [shape = 'f32[4,1]{1,0:T(4,128)}', space=vmem, size = 0x800, scoped, tag = 'scratch operand']
  %s0 = inlined_call_operand.hbm [shape: f32[4,32], index: 0, kind: input, shape index: {}]
  %s1 = inlined_call_operand.hbm [shape: f32[4,32], index: 1, kind: input, shape index: {}]
  %s2 = inlined_call_operand.vmem [shape: f32[4,1], index: 2, kind: output, shape index: {}]
  %s3 = sld [smem:[#allocation0]]
  $region46: #{tpu_custom_call.1} parent=0
    _
  %s5 = ssub.s32 1, %s3
  %s6 = scalar_select 0, %s5, %s3
  $region1: #{tpu_custom_call.1} parent=0
    #allocation6 [shape = 'u8[2048]{0}', space=vmem, size = 0x800, scoped, tag = 'input window, operand 0, single buffered']
    #allocation7 [shape = 's32[1]{0}', space=sflag, size = 0x4, scoped, tag = 'scoped memory for tpu_custom_call.1']
    #allocation8 [shape = 'u8[2048]{0}', space=vmem, size = 0x800, scoped, tag = 'input window, operand 1, single buffered']
    #allocation9 [shape = 's32[1]{0}', space=sflag, size = 0x4, scoped, tag = 'scoped memory for tpu_custom_call.1']
    %7 = vsyncpa [#allocation7], 0
    %8 = vsyncpa [#allocation9], 0
    // Predicated region
    $region2: #{tpu_custom_call.1} parent=1 // pred_check
      _
    $region3: #{tpu_custom_call.1} parent=1 // pred_check_branch
      %10 = sbr.rel (0) target = $region5
    $region4: #{tpu_custom_call.1} parent=1 // pred_region
      %12 = vsyncadd [#allocation7], 0
      %s14 = sshll.u32 %s0, 4
      %s15 = int_to_ptr.hbm [resolvable:$true] %s14
      %s16 = sshll.u32 [#allocation6], 4
      %s17 = int_to_ptr.vmem [resolvable:$true] %s16
      %19 = dma.hbm_to_vmem [thread:$0]  %s15, 64, %s17, [#allocation7]
    $region5: #{tpu_custom_call.1} parent=1 // pred_fallthru
      _
    // Predicated region
    $region6: #{tpu_custom_call.1} parent=1 // pred_check
      _
    $region7: #{tpu_custom_call.1} parent=1 // pred_check_branch
      %21 = sbr.rel (0) target = $region9
    $region8: #{tpu_custom_call.1} parent=1 // pred_region
      %23 = vsyncadd [#allocation9], 0
      %s25 = sshll.u32 %s1, 4
      %s26 = int_to_ptr.hbm [resolvable:$true] %s25
      %s27 = sshll.u32 [#allocation8], 4
      %s28 = int_to_ptr.vmem [resolvable:$true] %s27
      %30 = dma.hbm_to_vmem [thread:$0]  %s26, 64, %s28, [#allocation9]
    $region9: #{tpu_custom_call.1} parent=1 // pred_fallthru
      _
    // Predicated region
    $region10: #{tpu_custom_call.1} parent=1 // pred_check
      _
    $region11: #{tpu_custom_call.1} parent=1 // pred_check_branch
      %32 = sbr.rel (0) target = $region13
    $region12: #{tpu_custom_call.1} parent=1 // pred_region
      %34 = dma.done [#allocation7], 64
    $region13: #{tpu_custom_call.1} parent=1 // pred_fallthru
      _
    // Predicated region
    $region14: #{tpu_custom_call.1} parent=1 // pred_check
      _
    $region15: #{tpu_custom_call.1} parent=1 // pred_check_branch
      %36 = sbr.rel (0) target = $region17
    $region16: #{tpu_custom_call.1} parent=1 // pred_region
      %38 = dma.done [#allocation9], 64
    $region17: #{tpu_custom_call.1} parent=1 // pred_fallthru
      _
    %p39 = scmp.eq.s32.totalorder 0, 0
    // Predicated region
    $region18: #{tpu_custom_call.1} parent=1 // pred_check
      %p40 = pneg %p39
    $region19: #{tpu_custom_call.1} parent=1 // pred_check_branch
      %42 = sbr.rel (%p40) target = $region21
    $region20: #{tpu_custom_call.1} parent=1 // pred_region
      %v43 = vld [vmem:[#allocation6] sm:$0xf]
      %v44 = vmul.f32 %v43, 1.4285715
      %vm45 = vcmask 257024
      %46 = vst.msk [vmem:[#allocation2] sm:$0xf] %vm45, %v44
      %vm47 = vcmask 3072
      %48 = vst.msk [vmem:[#allocation3] sm:$0xf] %vm47, -inf
      %49 = vst.msk [vmem:[#allocation4] sm:$0xf] %vm47, 0.0
      %50 = vst.msk [vmem:[#allocation5] sm:$0xf] %vm47, 0.0
    $region21: #{tpu_custom_call.1} parent=1 // pred_fallthru
      _
    %v51 = vld [vmem:[#allocation2] sm:$0xf]
    %v52 = vld [vmem:[#allocation8] sm:$0xf]
    %vm53 = vcmask 261120
    %v55 = vsel %vm53, %v51, 0
    %v58 = vsel %vm53, %v52, 0
    %60 = vmatpush.xpose.msra.mxu0 0.0
    %61 = vmatpush.xpose.msra.mxu0 0.0
    %62 = vmatpush.xpose.msra.mxu0 0.0
    %63 = vmatpush.xpose.msra.mxu0 0.0
    %64 = vmatpush.xpose.msra.mxu0 0.0
    %65 = vmatpush.xpose.msra.mxu0 0.0
    %66 = vmatpush.xpose.msra.mxu0 0.0
    %67 = vmatpush.xpose.msra.mxu0 0.0
    %68 = vmatpush.xpose.msra.mxu0 0.0
    %69 = vmatpush.xpose.msra.mxu0 0.0
    %70 = vmatpush.xpose.msra.mxu0 0.0
    %71 = vmatpush.xpose.msra.mxu0 0.0
    %72 = vmatpush.xpose.msra.mxu0 0.0
    %73 = vmatpush.xpose.msra.mxu0 0.0
    %74 = vmatpush.xpose.msra.mxu0 0.0
    %75 = vmatpush.xpose.msra.mxu0 %v58
    %76 = vmatmul.f32.gmra.mxu0 %v55
    %v77 = vpop.f32.mrf.mxu0
    %v78 = vadd.f32 0.0, %v77
    %79 = vdwg.mxu0
    %s80 = smul.u32 0, 4
    %s81 = smul.u32 0, 4
    %s82 = sadd.s32 %s80, 2
    %s83 = sadd.s32 %s81, 4
    %p84 = scmp.lt.s32.totalorder %s82, %s83
    %s85 = sadd.s32 %s80, 6
    %p86 = scmp.gt.s32.totalorder %s85, %s81
    %p87 = pnand %p84, %p86
    %p88 = pneg %p87
    %s89 = ssub.s32 %s80, 2
    %p90 = scmp.lt.s32.totalorder %s89, %s83
    %p91 = scmp.gt.s32.totalorder %s82, %s81
    %p92 = pnand %p90, %p91
    %p93 = pneg %p92
    %p94 = por %p88, %p93
    // Predicated region
    $region22: #{tpu_custom_call.1} parent=1 // pred_check
      %p95 = pneg %p94
    $region23: #{tpu_custom_call.1} parent=1 // pred_check_branch
      %97 = sbr.rel (%p95) target = $region25
    $region24: #{tpu_custom_call.1} parent=1 // pred_region
      %v98 = vlaneseq
      %v99 = vshrl.u32 %v98, 7
      %v100 = vstv %s80
      %v101 = vadd.s32 %v100, %v99
      %v102 = vlaneseq
      %v103 = vand.u32 %v102, 127
      %v104 = vstv %s81
      %v105 = vadd.s32 %v104, %v103
      %v106 = vsub.s32 %v101, %v105
      %v107 = vld [vmem:[#allocation5] sm:$0xf]
      %vm108 = vcmp.lt.s32.totalorder %v106, 0
      %v109 = vsub.s32 0, %v106
      %v110 = vsel %vm108, %v109, %v106
      %vm111 = vcmp.eq.s32.totalorder %v110, 2
      %v112 = vsel %vm111, %v78, 0.0
      %vm113 = vcmask 27648
      %v114 = vsel %vm113, %v112, 0.0
      %115 = vadd.xlane.f32.xlu0 %v114
      %v116 = vpop.xlane.xlu0 %115
      %v117 = vadd.f32 %v107, %v116
      %vm118 = vcmask 3072
      %119 = vst.msk [vmem:[#allocation5] sm:$0xf] %vm118, %v117
    $region25: #{tpu_custom_call.1} parent=1 // pred_fallthru
      _
    %p120 = scmp.eq.s32.totalorder 0, 0
    // Predicated region
    $region26: #{tpu_custom_call.1} parent=1 // pred_check
      %p121 = pneg %p120
    $region27: #{tpu_custom_call.1} parent=1 // pred_check_branch
      %123 = sbr.rel (%p121) target = $region29
    $region28: #{tpu_custom_call.1} parent=1 // pred_region
      %v124 = vlaneseq
      %v125 = vshrl.u32 %v124, 7
      %v126 = vlaneseq
      %v127 = vand.u32 %v126, 127
      %vm128 = vcmp.eq.s32.totalorder %v125, %v127
      %v129 = vsel %vm128, -1e+30, %v78
      %v130 = vld [vmem:[#allocation3] sm:$0xf]
      %vm131 = vcmask 27648
      %v132 = vsel %vm131, %v129, -inf
      %133 = vmax.xlane.f32.xlu0 %v132
      %v134 = vpop.xlane.xlu0 %133
      %v135 = vmax.f32 %v130, %v134
      %137 = vset.pattern.permute.xlu0 0
      %138 = vperm.xlu0 %137, %v135
      %v139 = vpop.permute.xlu0 %138
      %v141 = vsub.f32 %v129, %v139
      %v142 = vmul.f32 %v141, 1.442695
      %v143 = vpow.pop %v142
      %v144 = vld [vmem:[#allocation4] sm:$0xf]
      %v145 = vsub.f32 %v130, %v135
      %v146 = vmul.f32 %v145, 1.442695
      %v147 = vpow.pop %v146
      %v148 = vmul.f32 %v144, %v147
      %v149 = vsel %vm131, %v143, 0.0
      %150 = vadd.xlane.f32.xlu0 %v149
      %v151 = vpop.xlane.xlu0 %150
      %v152 = vadd.f32 %v148, %v151
      %vm153 = vcmask 3072
      %154 = vst.msk [vmem:[#allocation4] sm:$0xf] %vm153, %v152
      %155 = vst.msk [vmem:[#allocation3] sm:$0xf] %vm153, %v135
    $region29: #{tpu_custom_call.1} parent=1 // pred_fallthru
      _
    %p156 = scmp.ne.s32.totalorder 0, 0
    // Predicated region
    $region30: #{tpu_custom_call.1} parent=1 // pred_check
      %p157 = pneg %p156
    $region31: #{tpu_custom_call.1} parent=1 // pred_check_branch
      %159 = sbr.rel (%p157) target = $region33
    $region32: #{tpu_custom_call.1} parent=1 // pred_region
      %v160 = vld [vmem:[#allocation3] sm:$0xf]
      %vm161 = vcmask 27648
      %v162 = vsel %vm161, %v78, -inf
      %163 = vmax.xlane.f32.xlu0 %v162
      %v164 = vpop.xlane.xlu0 %163
      %v165 = vmax.f32 %v160, %v164
      %167 = vset.pattern.permute.xlu0 0
      %168 = vperm.xlu0 %167, %v165
      %v169 = vpop.permute.xlu0 %168
      %v171 = vsub.f32 %v78, %v169
      %v172 = vmul.f32 %v171, 1.442695
      %v173 = vpow.pop %v172
      %v174 = vld [vmem:[#allocation4] sm:$0xf]
      %v175 = vsub.f32 %v160, %v165
      %v176 = vmul.f32 %v175, 1.442695
      %v177 = vpow.pop %v176
      %v178 = vmul.f32 %v174, %v177
      %v179 = vsel %vm161, %v173, 0.0
      %180 = vadd.xlane.f32.xlu0 %v179
      %v181 = vpop.xlane.xlu0 %180
      %v182 = vadd.f32 %v178, %v181
      %vm183 = vcmask 3072
      %184 = vst.msk [vmem:[#allocation4] sm:$0xf] %vm183, %v182
      %185 = vst.msk [vmem:[#allocation3] sm:$0xf] %vm183, %v165
    $region33: #{tpu_custom_call.1} parent=1 // pred_fallthru
      _
    // Predicated region
    $region34: #{tpu_custom_call.1} parent=1 // pred_check
      %p186 = pneg %p39
    $region35: #{tpu_custom_call.1} parent=1 // pred_check_branch
      %188 = sbr.rel (%p186) target = $region37
    $region36: #{tpu_custom_call.1} parent=1 // pred_region
      %v189 = vld [vmem:[#allocation3] sm:$0xf]
      %v190 = vld [vmem:[#allocation4] sm:$0xf]
      %v191 = vlog2.pop %v190
      %v192 = vmul.f32 %v191, 0.6931472
      %v193 = vadd.f32 %v189, %v192
      %v194 = vld [vmem:[#allocation5] sm:$0xf]
      %v195 = vsub.f32 %v193, %v194
      %vm196 = vcmask 3072
      %197 = vst.msk [vmem:[%s2] sm:$0xf] %vm196, %v195
    $region37: #{tpu_custom_call.1} parent=1 // pred_fallthru
      _
    // Predicated region
    $region38: #{tpu_custom_call.1} parent=1 // pred_check
      _
    $region39: #{tpu_custom_call.1} parent=1 // pred_check_branch
      %199 = sbr.rel (0) target = $region41
    $region40: #{tpu_custom_call.1} parent=1 // pred_region
      _
    $region41: #{tpu_custom_call.1} parent=1 // pred_fallthru
      _
    // Predicated region
    $region42: #{tpu_custom_call.1} parent=1 // pred_check
      _
    $region43: #{tpu_custom_call.1} parent=1 // pred_check_branch
      %201 = sbr.rel (0) target = $region45
    $region44: #{tpu_custom_call.1} parent=1 // pred_region
      _
    $region45: #{tpu_custom_call.1} parent=1 // pred_fallthru
      _
    %202 = vsyncpa [#allocation7], 1
    %203 = vsyncpa [#allocation9], 1

</llo_original>
